<compile_context>
chip_gen: v6e
topology: v6e:2x2x1
jax: 0.10.0
libtpu: 0.0.40
codegen_flags: <defaults>
</compile_context>

<pallas_src>
import numpy as np
import jax
import jax.numpy as jnp
from jax import lax
from jax.experimental import pallas as pl
from jax.experimental.pallas import tpu as pltpu

N_DOFS = 7
_B_TILE = 128          # batch tile along the lane axis (multiple of 128)

# --- Franka Panda constants (normally parsed from the URDF by
#     DifferentiableFrankaPanda; hard-coded deterministically here) ----------
_JOINT_LOWER = np.array(
    [-2.8973, -1.7628, -2.8973, -3.0718, -2.8973, -0.0175, -2.8973], np.float64)
_JOINT_UPPER = np.array(
    [2.8973, 1.7628, 2.8973, -0.0698, 2.8973, 3.7525, 2.8973], np.float64)

_HPI = np.pi / 2.0
# (xyz, rpy) of each revolute joint frame w.r.t. its parent link; all joints
# rotate about their local +z axis (panda_arm URDF).
_JOINT_ORIGINS = [
    ((0.0, 0.0, 0.333), (0.0, 0.0, 0.0)),
    ((0.0, 0.0, 0.0), (-_HPI, 0.0, 0.0)),
    ((0.0, -0.316, 0.0), (_HPI, 0.0, 0.0)),
    ((0.0825, 0.0, 0.0), (_HPI, 0.0, 0.0)),
    ((-0.0825, 0.384, 0.0), (-_HPI, 0.0, 0.0)),
    ((0.0, 0.0, 0.0), (_HPI, 0.0, 0.0)),
    ((0.088, 0.0, 0.0), (_HPI, 0.0, 0.0)),
]
_LINK8_ORIGIN = ((0.0, 0.0, 0.107), (0.0, 0.0, 0.0))
# TODO(synk): panda_virtual_ee_link offset taken as 0.10 m along +z of
# panda_link8 (hard-coded instead of parsed from the repo URDF).
_VEE_ORIGIN = ((0.0, 0.0, 0.10), (0.0, 0.0, 0.0))


def _rpy_to_R(rpy):
    r, p, y = rpy
    cr, sr = np.cos(r), np.sin(r)
    cp, sp = np.cos(p), np.sin(p)
    cy, sy = np.cos(y), np.sin(y)
    Rx = np.array([[1, 0, 0], [0, cr, -sr], [0, sr, cr]])
    Ry = np.array([[cp, 0, sp], [0, 1, 0], [-sp, 0, cp]])
    Rz = np.array([[cy, -sy, 0], [sy, cy, 0], [0, 0, 1]])
    return Rz @ Ry @ Rx


def _make_T(xyz, rpy):
    T = np.eye(4)
    T[:3, :3] = _rpy_to_R(rpy)
    T[:3, 3] = np.asarray(xyz)
    return T


def _snap(M, tol=1e-9):
    """Snap near-0 / near-+-1 entries so zero coefficients fold at trace time."""
    M = np.array(M, dtype=np.float64)
    M[np.abs(M) < tol] = 0.0
    M[np.abs(M - 1.0) < tol] = 1.0
    M[np.abs(M + 1.0) < tol] = -1.0
    return M


# Per-joint constant rotation (3x3) and translation (3,) of the joint frame.
_RF, _PF = [], []
for _xyz, _rpy in _JOINT_ORIGINS:
    _T = _make_T(_xyz, _rpy)
    _RF.append(_snap(_T[:3, :3]))
    _PF.append(np.array(_T[:3, 3], np.float64))
# Combined fixed tail translation: panda_link7 -> panda_link8 -> virtual_ee.
_T_TAIL = _make_T(*_LINK8_ORIGIN) @ _make_T(*_VEE_ORIGIN)
_P_TAIL = np.array(_T_TAIL[:3, 3], np.float64)          # rotation part is identity


# ----------------------------- Pallas kernel --------------------------------
def _lincomb(cols, coeffs, extra=None):
    """sum_k coeffs[k] * cols[k] (+ extra); zero / +-1 coefficients folded."""
    acc = extra
    for coef, col in zip(coeffs, cols):
        c = float(coef)
        if abs(c) < 1e-12:
            continue
        term = col if c == 1.0 else (-col if c == -1.0 else c * col)
        acc = term if acc is None else acc + term
    if acc is None:
        acc = jnp.zeros_like(cols[0])
    return acc


def _kinematic_kernel(qa_ref, out_ref):
    # qa_ref: (16, Bt)  rows 0..7 = joint state (7 + pad), rows 8..15 = actions
    # out_ref: (16, Bt) rows 0..6 = clamped joints, rows 8..10 = ee xyz
    bt = qa_ref.shape[1]

    # joint-delta integration (whole slab, one VPU add)
    q_slab = qa_ref[0:8, :] + qa_ref[8:16, :]                     # (8, Bt)

    # per-joint clamp (torch.where semantics) + cos/sin, batched over lanes
    q_rows, c_rows, s_rows = [], [], []
    for i in range(N_DOFS):
        qi = q_slab[i:i + 1, :]                                   # (1, Bt)
        hi = float(_JOINT_UPPER[i])
        lo = float(_JOINT_LOWER[i])
        qi = jnp.where(qi > hi, hi, qi)
        qi = jnp.where(qi < lo, lo, qi)
        q_rows.append(qi)
        c_rows.append(jnp.cos(qi))
        s_rows.append(jnp.sin(qi))

    # Running transform per lane: rotation columns col0..2 and translation t,
    # each a (3, Bt) slab (rows = x, y, z).  Start at identity.
    rows3 = lax.broadcasted_iota(jnp.int32, (3, bt), 0)
    col0 = (rows3 == 0).astype(jnp.float32)
    col1 = (rows3 == 1).astype(jnp.float32)
    col2 = (rows3 == 2).astype(jnp.float32)
    t = jnp.zeros((3, bt), jnp.float32)

    # T <- T @ F_i @ Rz(q_i), all on the VPU (constant coeffs folded at trace).
    for i in range(N_DOFS):
        Rf, p = _RF[i], _PF[i]
        cols = (col0, col1, col2)
        m0 = _lincomb(cols, Rf[:, 0])         # (R @ Rf)[:, 0]
        m1 = _lincomb(cols, Rf[:, 1])
        m2 = _lincomb(cols, Rf[:, 2])
        t = _lincomb(cols, p, extra=t)        # R @ p + t
        ci, si = c_rows[i], s_rows[i]         # (1, Bt) broadcast over sublanes
        col0 = ci * m0 + si * m1              # apply Rz(q_i)
        col1 = ci * m1 - si * m0
        col2 = m2

    # Fixed tail: ee = R @ p_tail + t
    ee = _lincomb((col0, col1, col2), _P_TAIL, extra=t)           # (3, Bt)

    # Lane-dense output slab: rows 0..6 joints, 7 pad, 8..10 ee, 11..15 pad.
    zero_row = jnp.zeros((1, bt), jnp.float32)
    for i in range(N_DOFS):
        out_ref[i:i + 1, :] = q_rows[i]
    out_ref[7:8, :] = zero_row
    out_ref[8:11, :] = ee
    out_ref[11:16, :] = jnp.zeros((5, bt), jnp.float32)


# ------------------------------ wrappers -------------------------------------
@jax.jit
def _fk_pallas(q, a):
    """q, a: (B, 7) float32 -> (next_q (B, 7), ee_pos (B, 3))."""
    B = q.shape[0]
    Bp = pl.cdiv(B, _B_TILE) * _B_TILE
    # Lane axis = batch; sublane axis = joints (7 -> 8 pad).  One input slab.
    qa = jnp.concatenate(
        [jnp.pad(q.T, ((0, 1), (0, Bp - B))),
         jnp.pad(a.T, ((0, 1), (0, Bp - B)))], axis=0)            # (16, Bp)
    out = pl.pallas_call(
        _kinematic_kernel,
        out_shape=jax.ShapeDtypeStruct((16, Bp), jnp.float32),
        grid=(Bp // _B_TILE,),
        in_specs=[pl.BlockSpec((16, _B_TILE), lambda i: (0, i))],
        out_specs=pl.BlockSpec((16, _B_TILE), lambda i: (0, i)),
        compiler_params=pltpu.CompilerParams(
            dimension_semantics=("parallel",)),   # batch tiles across TCs (v7x)
    )(qa)
    next_q = out[:N_DOFS, :B].T                                   # (B, 7)
    ee_pos = out[N_DOFS + 1:N_DOFS + 4, :B].T                     # (B, 3)
    return next_q, ee_pos


def kinematic_forward_batched(joint_states, actions=0.0):
    """Batched KinematicModel.forward: (B,7),(B,7)->((B,7) next_q, (B,3) ee)."""
    joint_states = jnp.asarray(joint_states, jnp.float32).reshape(-1, N_DOFS)
    B = joint_states.shape[0]
    actions = jnp.broadcast_to(jnp.asarray(actions, jnp.float32), (B, N_DOFS))
    return _fk_pallas(joint_states, actions)


def kinematic_forward(joint_state, actions=0.0):
    """Single-sample equivalent of KinematicModel.forward -> ((7,), (3,))."""
    # TODO(synk): single-sample calls are launch-overhead dominated; prefer the
    # batched entry point (or fuse into a surrounding kernel) in real use.
    nq, ee = kinematic_forward_batched(
        jnp.asarray(joint_state, jnp.float32).reshape(1, N_DOFS), actions)
    return nq[0], ee[0]


# ------------------------------ reference ------------------------------------
def _reference_forward(joint_state, actions):
    q = np.asarray(joint_state, np.float64) + np.asarray(actions, np.float64)
    q = np.where(q > _JOINT_UPPER, _JOINT_UPPER, q)
    q = np.where(q < _JOINT_LOWER, _JOINT_LOWER, q)
    T = np.eye(4)
    for i in range(N_DOFS):
        cz, sz = np.cos(q[i]), np.sin(q[i])
        Rz = np.array([[cz, -sz, 0, 0], [sz, cz, 0, 0], [0, 0, 1, 0], [0, 0, 0, 1]])
        T = T @ _make_T(*_JOINT_ORIGINS[i]) @ Rz
    T = T @ _make_T(*_LINK8_ORIGIN) @ _make_T(*_VEE_ORIGIN)
    return q, T[:3, 3]


if __name__ == "__main__":
    key = jax.random.PRNGKey(0)
    k1, k2, k3, k4 = jax.random.split(key, 4)

    # --- single sample (matches the torch module's forward signature) -------
    joint_state = jax.random.uniform(k1, (N_DOFS,), jnp.float32, -1.0, 1.0)
    actions = jax.random.uniform(k2, (N_DOFS,), jnp.float32, -0.1, 0.1)

    next_q, ee_pos = kinematic_forward(joint_state, actions)
    jax.block_until_ready((next_q, ee_pos))

    assert next_q.shape == (N_DOFS,) and next_q.dtype == jnp.float32
    assert ee_pos.shape == (3,) and ee_pos.dtype == jnp.float32

    ref_q, ref_ee = _reference_forward(np.asarray(joint_state), np.asarray(actions))
    np.testing.assert_allclose(np.asarray(next_q), ref_q, rtol=1e-4, atol=1e-4)
    np.testing.assert_allclose(np.asarray(ee_pos), ref_ee, rtol=2e-3, atol=2e-3)

    # --- small batch exercising the lane-batched kernel + grid (2 tiles) ----
    B = 200
    js_b = jax.random.uniform(k3, (B, N_DOFS), jnp.float32, -1.5, 1.5)
    act_b = jax.random.uniform(k4, (B, N_DOFS), jnp.float32, -0.2, 0.2)
    nq_b, ee_b = kinematic_forward_batched(js_b, act_b)
    jax.block_until_ready((nq_b, ee_b))
    assert nq_b.shape == (B, N_DOFS) and ee_b.shape == (B, 3)

    js_np, act_np = np.asarray(js_b), np.asarray(act_b)
    nq_np, ee_np = np.asarray(nq_b), np.asarray(ee_b)
    for b in range(B):
        rq, re = _reference_forward(js_np[b], act_np[b])
        np.testing.assert_allclose(nq_np[b], rq, rtol=1e-4, atol=1e-4)
        np.testing.assert_allclose(ee_np[b], re, rtol=2e-3, atol=2e-3)

    print("KERNEL_OK")
</pallas_src>

<mosaic_0001>
module attributes {stable_mosaic.version = 11 : i64} {
  func.func @_kinematic_kernel(%arg0: i32, %arg1: memref<16x128xf32, #tpu.memory_space<vmem>>, %arg2: memref<16x128xf32, #tpu.memory_space<vmem>>) attributes {dimension_semantics = [#tpu.dimension_semantics<parallel>], iteration_bounds = array<i64: 1>, scalar_prefetch = 0 : i64, scratch_operands = 0 : i64, tpu.core_type = #tpu.core_type<tc>, window_params = [{transform_indices = @transform_0, window_bounds = array<i64: 16, 128>}, {transform_indices = @transform_1, window_bounds = array<i64: 16, 128>}]} {
    %c0 = arith.constant 0 : index
    %c0_0 = arith.constant 0 : index
    %0 = vector.load %arg1[%c0, %c0_0] : memref<16x128xf32, #tpu.memory_space<vmem>>, vector<8x128xf32>
    %c8 = arith.constant 8 : index
    %c0_1 = arith.constant 0 : index
    %1 = vector.load %arg1[%c8, %c0_1] : memref<16x128xf32, #tpu.memory_space<vmem>>, vector<8x128xf32>
    %2 = arith.addf %0, %1 : vector<8x128xf32>
    %3 = vector.extract_strided_slice %2 {offsets = [0, 0], sizes = [1, 128], strides = [1, 1]} : vector<8x128xf32> to vector<1x128xf32>
    %cst = arith.constant 2.897300e+00 : f32
    %4 = vector.broadcast %cst : f32 to vector<1x128xf32>
    %5 = arith.cmpf ogt, %3, %4 : vector<1x128xf32>
    %cst_2 = arith.constant 2.897300e+00 : f32
    %6 = vector.broadcast %cst_2 : f32 to vector<1x128xf32>
    %7 = arith.select %5, %6, %3 : vector<1x128xi1>, vector<1x128xf32>
    %cst_3 = arith.constant -2.897300e+00 : f32
    %8 = vector.broadcast %cst_3 : f32 to vector<1x128xf32>
    %9 = arith.cmpf olt, %7, %8 : vector<1x128xf32>
    %cst_4 = arith.constant -2.897300e+00 : f32
    %10 = vector.broadcast %cst_4 : f32 to vector<1x128xf32>
    %11 = arith.select %9, %10, %7 : vector<1x128xi1>, vector<1x128xf32>
    %12 = math.cos %11 : vector<1x128xf32>
    %13 = math.sin %11 : vector<1x128xf32>
    %14 = vector.extract_strided_slice %2 {offsets = [1, 0], sizes = [1, 128], strides = [1, 1]} : vector<8x128xf32> to vector<1x128xf32>
    %cst_5 = arith.constant 1.762800e+00 : f32
    %15 = vector.broadcast %cst_5 : f32 to vector<1x128xf32>
    %16 = arith.cmpf ogt, %14, %15 : vector<1x128xf32>
    %cst_6 = arith.constant 1.762800e+00 : f32
    %17 = vector.broadcast %cst_6 : f32 to vector<1x128xf32>
    %18 = arith.select %16, %17, %14 : vector<1x128xi1>, vector<1x128xf32>
    %cst_7 = arith.constant -1.762800e+00 : f32
    %19 = vector.broadcast %cst_7 : f32 to vector<1x128xf32>
    %20 = arith.cmpf olt, %18, %19 : vector<1x128xf32>
    %cst_8 = arith.constant -1.762800e+00 : f32
    %21 = vector.broadcast %cst_8 : f32 to vector<1x128xf32>
    %22 = arith.select %20, %21, %18 : vector<1x128xi1>, vector<1x128xf32>
    %23 = math.cos %22 : vector<1x128xf32>
    %24 = math.sin %22 : vector<1x128xf32>
    %25 = vector.extract_strided_slice %2 {offsets = [2, 0], sizes = [1, 128], strides = [1, 1]} : vector<8x128xf32> to vector<1x128xf32>
    %cst_9 = arith.constant 2.897300e+00 : f32
    %26 = vector.broadcast %cst_9 : f32 to vector<1x128xf32>
    %27 = arith.cmpf ogt, %25, %26 : vector<1x128xf32>
    %cst_10 = arith.constant 2.897300e+00 : f32
    %28 = vector.broadcast %cst_10 : f32 to vector<1x128xf32>
    %29 = arith.select %27, %28, %25 : vector<1x128xi1>, vector<1x128xf32>
    %cst_11 = arith.constant -2.897300e+00 : f32
    %30 = vector.broadcast %cst_11 : f32 to vector<1x128xf32>
    %31 = arith.cmpf olt, %29, %30 : vector<1x128xf32>
    %cst_12 = arith.constant -2.897300e+00 : f32
    %32 = vector.broadcast %cst_12 : f32 to vector<1x128xf32>
    %33 = arith.select %31, %32, %29 : vector<1x128xi1>, vector<1x128xf32>
    %34 = math.cos %33 : vector<1x128xf32>
    %35 = math.sin %33 : vector<1x128xf32>
    %36 = vector.extract_strided_slice %2 {offsets = [3, 0], sizes = [1, 128], strides = [1, 1]} : vector<8x128xf32> to vector<1x128xf32>
    %cst_13 = arith.constant -6.980000e-02 : f32
    %37 = vector.broadcast %cst_13 : f32 to vector<1x128xf32>
    %38 = arith.cmpf ogt, %36, %37 : vector<1x128xf32>
    %cst_14 = arith.constant -6.980000e-02 : f32
    %39 = vector.broadcast %cst_14 : f32 to vector<1x128xf32>
    %40 = arith.select %38, %39, %36 : vector<1x128xi1>, vector<1x128xf32>
    %cst_15 = arith.constant -3.071800e+00 : f32
    %41 = vector.broadcast %cst_15 : f32 to vector<1x128xf32>
    %42 = arith.cmpf olt, %40, %41 : vector<1x128xf32>
    %cst_16 = arith.constant -3.071800e+00 : f32
    %43 = vector.broadcast %cst_16 : f32 to vector<1x128xf32>
    %44 = arith.select %42, %43, %40 : vector<1x128xi1>, vector<1x128xf32>
    %45 = math.cos %44 : vector<1x128xf32>
    %46 = math.sin %44 : vector<1x128xf32>
    %47 = vector.extract_strided_slice %2 {offsets = [4, 0], sizes = [1, 128], strides = [1, 1]} : vector<8x128xf32> to vector<1x128xf32>
    %cst_17 = arith.constant 2.897300e+00 : f32
    %48 = vector.broadcast %cst_17 : f32 to vector<1x128xf32>
    %49 = arith.cmpf ogt, %47, %48 : vector<1x128xf32>
    %cst_18 = arith.constant 2.897300e+00 : f32
    %50 = vector.broadcast %cst_18 : f32 to vector<1x128xf32>
    %51 = arith.select %49, %50, %47 : vector<1x128xi1>, vector<1x128xf32>
    %cst_19 = arith.constant -2.897300e+00 : f32
    %52 = vector.broadcast %cst_19 : f32 to vector<1x128xf32>
    %53 = arith.cmpf olt, %51, %52 : vector<1x128xf32>
    %cst_20 = arith.constant -2.897300e+00 : f32
    %54 = vector.broadcast %cst_20 : f32 to vector<1x128xf32>
    %55 = arith.select %53, %54, %51 : vector<1x128xi1>, vector<1x128xf32>
    %56 = math.cos %55 : vector<1x128xf32>
    %57 = math.sin %55 : vector<1x128xf32>
    %58 = vector.extract_strided_slice %2 {offsets = [5, 0], sizes = [1, 128], strides = [1, 1]} : vector<8x128xf32> to vector<1x128xf32>
    %cst_21 = arith.constant 3.752500e+00 : f32
    %59 = vector.broadcast %cst_21 : f32 to vector<1x128xf32>
    %60 = arith.cmpf ogt, %58, %59 : vector<1x128xf32>
    %cst_22 = arith.constant 3.752500e+00 : f32
    %61 = vector.broadcast %cst_22 : f32 to vector<1x128xf32>
    %62 = arith.select %60, %61, %58 : vector<1x128xi1>, vector<1x128xf32>
    %cst_23 = arith.constant -1.750000e-02 : f32
    %63 = vector.broadcast %cst_23 : f32 to vector<1x128xf32>
    %64 = arith.cmpf olt, %62, %63 : vector<1x128xf32>
    %cst_24 = arith.constant -1.750000e-02 : f32
    %65 = vector.broadcast %cst_24 : f32 to vector<1x128xf32>
    %66 = arith.select %64, %65, %62 : vector<1x128xi1>, vector<1x128xf32>
    %67 = math.cos %66 : vector<1x128xf32>
    %68 = math.sin %66 : vector<1x128xf32>
    %69 = vector.extract_strided_slice %2 {offsets = [6, 0], sizes = [1, 128], strides = [1, 1]} : vector<8x128xf32> to vector<1x128xf32>
    %cst_25 = arith.constant 2.897300e+00 : f32
    %70 = vector.broadcast %cst_25 : f32 to vector<1x128xf32>
    %71 = arith.cmpf ogt, %69, %70 : vector<1x128xf32>
    %cst_26 = arith.constant 2.897300e+00 : f32
    %72 = vector.broadcast %cst_26 : f32 to vector<1x128xf32>
    %73 = arith.select %71, %72, %69 : vector<1x128xi1>, vector<1x128xf32>
    %cst_27 = arith.constant -2.897300e+00 : f32
    %74 = vector.broadcast %cst_27 : f32 to vector<1x128xf32>
    %75 = arith.cmpf olt, %73, %74 : vector<1x128xf32>
    %cst_28 = arith.constant -2.897300e+00 : f32
    %76 = vector.broadcast %cst_28 : f32 to vector<1x128xf32>
    %77 = arith.select %75, %76, %73 : vector<1x128xi1>, vector<1x128xf32>
    %78 = tpu.iota {dimensions = array<i32: 0>} : vector<3x128xi32>
    %c0_i32 = arith.constant 0 : i32
    %79 = vector.broadcast %c0_i32 : i32 to vector<3x128xi32>
    %80 = arith.cmpi eq, %78, %79 : vector<3x128xi32>
    %81 = arith.extui %80 : vector<3x128xi1> to vector<3x128xi32>
    %82 = arith.sitofp %81 : vector<3x128xi32> to vector<3x128xf32>
    %c1_i32 = arith.constant 1 : i32
    %83 = vector.broadcast %c1_i32 : i32 to vector<3x128xi32>
    %84 = arith.cmpi eq, %78, %83 : vector<3x128xi32>
    %85 = arith.extui %84 : vector<3x128xi1> to vector<3x128xi32>
    %86 = arith.sitofp %85 : vector<3x128xi32> to vector<3x128xf32>
    %c2_i32 = arith.constant 2 : i32
    %87 = vector.broadcast %c2_i32 : i32 to vector<3x128xi32>
    %88 = arith.cmpi eq, %78, %87 : vector<3x128xi32>
    %89 = arith.extui %88 : vector<3x128xi1> to vector<3x128xi32>
    %90 = arith.sitofp %89 : vector<3x128xi32> to vector<3x128xf32>
    %cst_29 = arith.constant 0.000000e+00 : f32
    %91 = vector.broadcast %cst_29 : f32 to vector<3x128xf32>
    %cst_30 = arith.constant 3.330000e-01 : f32
    %92 = vector.broadcast %cst_30 : f32 to vector<3x128xf32>
    %93 = arith.mulf %92, %90 : vector<3x128xf32>
    %94 = arith.addf %91, %93 : vector<3x128xf32>
    %95 = vector.broadcast %12 : vector<1x128xf32> to vector<3x128xf32>
    %96 = arith.mulf %95, %82 : vector<3x128xf32>
    %97 = vector.broadcast %13 : vector<1x128xf32> to vector<3x128xf32>
    %98 = arith.mulf %97, %86 : vector<3x128xf32>
    %99 = arith.addf %96, %98 : vector<3x128xf32>
    %100 = vector.broadcast %12 : vector<1x128xf32> to vector<3x128xf32>
    %101 = arith.mulf %100, %86 : vector<3x128xf32>
    %102 = vector.broadcast %13 : vector<1x128xf32> to vector<3x128xf32>
    %103 = arith.mulf %102, %82 : vector<3x128xf32>
    %104 = arith.subf %101, %103 : vector<3x128xf32>
    %cst_31 = arith.constant 0.000000e+00 : f32
    %105 = vector.broadcast %cst_31 : f32 to vector<3x128xf32>
    %106 = arith.subf %105, %90 : vector<3x128xf32>
    %107 = vector.broadcast %23 : vector<1x128xf32> to vector<3x128xf32>
    %108 = arith.mulf %107, %99 : vector<3x128xf32>
    %109 = vector.broadcast %24 : vector<1x128xf32> to vector<3x128xf32>
    %110 = arith.mulf %109, %106 : vector<3x128xf32>
    %111 = arith.addf %108, %110 : vector<3x128xf32>
    %112 = vector.broadcast %23 : vector<1x128xf32> to vector<3x128xf32>
    %113 = arith.mulf %112, %106 : vector<3x128xf32>
    %114 = vector.broadcast %24 : vector<1x128xf32> to vector<3x128xf32>
    %115 = arith.mulf %114, %99 : vector<3x128xf32>
    %116 = arith.subf %113, %115 : vector<3x128xf32>
    %cst_32 = arith.constant 0.000000e+00 : f32
    %117 = vector.broadcast %cst_32 : f32 to vector<3x128xf32>
    %118 = arith.subf %117, %116 : vector<3x128xf32>
    %cst_33 = arith.constant -3.160000e-01 : f32
    %119 = vector.broadcast %cst_33 : f32 to vector<3x128xf32>
    %120 = arith.mulf %119, %116 : vector<3x128xf32>
    %121 = arith.addf %94, %120 : vector<3x128xf32>
    %122 = vector.broadcast %34 : vector<1x128xf32> to vector<3x128xf32>
    %123 = arith.mulf %122, %111 : vector<3x128xf32>
    %124 = vector.broadcast %35 : vector<1x128xf32> to vector<3x128xf32>
    %125 = arith.mulf %124, %104 : vector<3x128xf32>
    %126 = arith.addf %123, %125 : vector<3x128xf32>
    %127 = vector.broadcast %34 : vector<1x128xf32> to vector<3x128xf32>
    %128 = arith.mulf %127, %104 : vector<3x128xf32>
    %129 = vector.broadcast %35 : vector<1x128xf32> to vector<3x128xf32>
    %130 = arith.mulf %129, %111 : vector<3x128xf32>
    %131 = arith.subf %128, %130 : vector<3x128xf32>
    %cst_34 = arith.constant 0.000000e+00 : f32
    %132 = vector.broadcast %cst_34 : f32 to vector<3x128xf32>
    %133 = arith.subf %132, %131 : vector<3x128xf32>
    %cst_35 = arith.constant 8.250000e-02 : f32
    %134 = vector.broadcast %cst_35 : f32 to vector<3x128xf32>
    %135 = arith.mulf %134, %126 : vector<3x128xf32>
    %136 = arith.addf %121, %135 : vector<3x128xf32>
    %137 = vector.broadcast %45 : vector<1x128xf32> to vector<3x128xf32>
    %138 = arith.mulf %137, %126 : vector<3x128xf32>
    %139 = vector.broadcast %46 : vector<1x128xf32> to vector<3x128xf32>
    %140 = arith.mulf %139, %118 : vector<3x128xf32>
    %141 = arith.addf %138, %140 : vector<3x128xf32>
    %142 = vector.broadcast %45 : vector<1x128xf32> to vector<3x128xf32>
    %143 = arith.mulf %142, %118 : vector<3x128xf32>
    %144 = vector.broadcast %46 : vector<1x128xf32> to vector<3x128xf32>
    %145 = arith.mulf %144, %126 : vector<3x128xf32>
    %146 = arith.subf %143, %145 : vector<3x128xf32>
    %cst_36 = arith.constant 0.000000e+00 : f32
    %147 = vector.broadcast %cst_36 : f32 to vector<3x128xf32>
    %148 = arith.subf %147, %133 : vector<3x128xf32>
    %cst_37 = arith.constant -8.250000e-02 : f32
    %149 = vector.broadcast %cst_37 : f32 to vector<3x128xf32>
    %150 = arith.mulf %149, %141 : vector<3x128xf32>
    %151 = arith.addf %136, %150 : vector<3x128xf32>
    %cst_38 = arith.constant 3.840000e-01 : f32
    %152 = vector.broadcast %cst_38 : f32 to vector<3x128xf32>
    %153 = arith.mulf %152, %146 : vector<3x128xf32>
    %154 = arith.addf %151, %153 : vector<3x128xf32>
    %155 = vector.broadcast %56 : vector<1x128xf32> to vector<3x128xf32>
    %156 = arith.mulf %155, %141 : vector<3x128xf32>
    %157 = vector.broadcast %57 : vector<1x128xf32> to vector<3x128xf32>
    %158 = arith.mulf %157, %148 : vector<3x128xf32>
    %159 = arith.addf %156, %158 : vector<3x128xf32>
    %160 = vector.broadcast %67 : vector<1x128xf32> to vector<3x128xf32>
    %161 = arith.mulf %160, %159 : vector<3x128xf32>
    %162 = vector.broadcast %68 : vector<1x128xf32> to vector<3x128xf32>
    %163 = arith.mulf %162, %146 : vector<3x128xf32>
    %164 = arith.addf %161, %163 : vector<3x128xf32>
    %165 = vector.broadcast %67 : vector<1x128xf32> to vector<3x128xf32>
    %166 = arith.mulf %165, %146 : vector<3x128xf32>
    %167 = vector.broadcast %68 : vector<1x128xf32> to vector<3x128xf32>
    %168 = arith.mulf %167, %159 : vector<3x128xf32>
    %169 = arith.subf %166, %168 : vector<3x128xf32>
    %cst_39 = arith.constant 0.000000e+00 : f32
    %170 = vector.broadcast %cst_39 : f32 to vector<3x128xf32>
    %171 = arith.subf %170, %169 : vector<3x128xf32>
    %cst_40 = arith.constant 0.0879999995 : f32
    %172 = vector.broadcast %cst_40 : f32 to vector<3x128xf32>
    %173 = arith.mulf %172, %164 : vector<3x128xf32>
    %174 = arith.addf %154, %173 : vector<3x128xf32>
    %cst_41 = arith.constant 2.070000e-01 : f32
    %175 = vector.broadcast %cst_41 : f32 to vector<3x128xf32>
    %176 = arith.mulf %175, %171 : vector<3x128xf32>
    %177 = arith.addf %174, %176 : vector<3x128xf32>
    %cst_42 = arith.constant 0.000000e+00 : f32
    %178 = vector.broadcast %cst_42 : f32 to vector<1x128xf32>
    %c0_43 = arith.constant 0 : index
    %c0_44 = arith.constant 0 : index
    %179 = vector.load %arg2[%c0_43, %c0_44] : memref<16x128xf32, #tpu.memory_space<vmem>>, vector<1x128xf32>
    tpu.vector_store %arg2[%c0_43, %c0_44], %11 {strides = array<i32>} : memref<16x128xf32, #tpu.memory_space<vmem>>, vector<1x128xf32>,
    %c1 = arith.constant 1 : index
    %c0_45 = arith.constant 0 : index
    %180 = vector.load %arg2[%c1, %c0_45] : memref<16x128xf32, #tpu.memory_space<vmem>>, vector<1x128xf32>
    tpu.vector_store %arg2[%c1, %c0_45], %22 {strides = array<i32>} : memref<16x128xf32, #tpu.memory_space<vmem>>, vector<1x128xf32>,
    %c2 = arith.constant 2 : index
    %c0_46 = arith.constant 0 : index
    %181 = vector.load %arg2[%c2, %c0_46] : memref<16x128xf32, #tpu.memory_space<vmem>>, vector<1x128xf32>
    tpu.vector_store %arg2[%c2, %c0_46], %33 {strides = array<i32>} : memref<16x128xf32, #tpu.memory_space<vmem>>, vector<1x128xf32>,
    %c3 = arith.constant 3 : index
    %c0_47 = arith.constant 0 : index
    %182 = vector.load %arg2[%c3, %c0_47] : memref<16x128xf32, #tpu.memory_space<vmem>>, vector<1x128xf32>
    tpu.vector_store %arg2[%c3, %c0_47], %44 {strides = array<i32>} : memref<16x128xf32, #tpu.memory_space<vmem>>, vector<1x128xf32>,
    %c4 = arith.constant 4 : index
    %c0_48 = arith.constant 0 : index
    %183 = vector.load %arg2[%c4, %c0_48] : memref<16x128xf32, #tpu.memory_space<vmem>>, vector<1x128xf32>
    tpu.vector_store %arg2[%c4, %c0_48], %55 {strides = array<i32>} : memref<16x128xf32, #tpu.memory_space<vmem>>, vector<1x128xf32>,
    %c5 = arith.constant 5 : index
    %c0_49 = arith.constant 0 : index
    %184 = vector.load %arg2[%c5, %c0_49] : memref<16x128xf32, #tpu.memory_space<vmem>>, vector<1x128xf32>
    tpu.vector_store %arg2[%c5, %c0_49], %66 {strides = array<i32>} : memref<16x128xf32, #tpu.memory_space<vmem>>, vector<1x128xf32>,
    %c6 = arith.constant 6 : index
    %c0_50 = arith.constant 0 : index
    %185 = vector.load %arg2[%c6, %c0_50] : memref<16x128xf32, #tpu.memory_space<vmem>>, vector<1x128xf32>
    tpu.vector_store %arg2[%c6, %c0_50], %77 {strides = array<i32>} : memref<16x128xf32, #tpu.memory_space<vmem>>, vector<1x128xf32>,
    %c7 = arith.constant 7 : index
    %c0_51 = arith.constant 0 : index
    %186 = vector.load %arg2[%c7, %c0_51] : memref<16x128xf32, #tpu.memory_space<vmem>>, vector<1x128xf32>
    tpu.vector_store %arg2[%c7, %c0_51], %178 {strides = array<i32>} : memref<16x128xf32, #tpu.memory_space<vmem>>, vector<1x128xf32>,
    %c8_52 = arith.constant 8 : index
    %c0_53 = arith.constant 0 : index
    %187 = vector.load %arg2[%c8_52, %c0_53] : memref<16x128xf32, #tpu.memory_space<vmem>>, vector<3x128xf32>
    tpu.vector_store %arg2[%c8_52, %c0_53], %177 {strides = array<i32>} : memref<16x128xf32, #tpu.memory_space<vmem>>, vector<3x128xf32>,
    %cst_54 = arith.constant 0.000000e+00 : f32
    %188 = vector.broadcast %cst_54 : f32 to vector<5x128xf32>
    %c11 = arith.constant 11 : index
    %c0_55 = arith.constant 0 : index
    %189 = vector.load %arg2[%c11, %c0_55] : memref<16x128xf32, #tpu.memory_space<vmem>>, vector<5x128xf32>
    tpu.vector_store %arg2[%c11, %c0_55], %188 {strides = array<i32>} : memref<16x128xf32, #tpu.memory_space<vmem>>, vector<5x128xf32>,
    return
  }
  func.func @transform_0(%arg0: i32) -> (i32, i32) {
    %c0_i32 = arith.constant 0 : i32
    %c0_i32_0 = arith.constant 0 : i32
    return %c0_i32, %arg0 : i32, i32
  }
  func.func @transform_1(%arg0: i32) -> (i32, i32) {
    %c0_i32 = arith.constant 0 : i32
    %c0_i32_0 = arith.constant 0 : i32
    return %c0_i32, %arg0 : i32, i32
  }
}

</mosaic_0001>

<llo_original>
// kernel: _fk_pallas.1
$region0: #{_fk_pallas.1}
  #allocation0 [shape = 'u32[]', space=smem, size = 0x4, offset = 0x4, fixed_abs, tag = 'smem constant byte address 0x4 - core index']
  #allocation1 [shape = 'u32[144,128]{1,0:T(1,128)}', space=vmem, size = 0x12000, scoped, tag = 'internal scratch']
  %s0 = inlined_call_operand.vmem [shape: f32[16,128], index: 0, kind: input, shape index: {}]
  %s1 = inlined_call_operand.vmem [shape: f32[16,128], index: 1, kind: output, shape index: {}]
  %s2 = sld [smem:[#allocation0]]
  $region14: #{_fk_pallas.1} parent=0
    _
  %s4 = ssub.s32 1, %s2
  %s5 = scalar_select 0, %s4, %s2
  // Predicated region
  $region2: #{_fk_pallas.1} parent=0 // pred_check
    _
  $region3: #{_fk_pallas.1} parent=0 // pred_check_branch
    %7 = sbr.rel (0) target = $region5
  $region4: #{_fk_pallas.1} parent=0 // pred_region
    _
  $region5: #{_fk_pallas.1} parent=0 // pred_fallthru
    _
  %v8 = vld [vmem:[%s0] sm:$0xff]
  %v9 = vld [vmem:[%s0 + $0x8] sm:$0xff]
  %v10 = vadd.f32 %v8, %v9
  %vm11 = vcmp.gt.f32.partialorder %v10, 2.8973
  %v12 = vsel %vm11, 2.8973, %v10
  %vm13 = vcmp.lt.f32.partialorder %v12, -2.8973
  %v14 = vsel %vm13, -2.8973, %v12
  %v15 = vand.u32 2147483647, %v14
  %vm16 = vcmp.le.f32.partialorder %v15, 0.7853982
  %vm17 = vcmp.lt.s32.totalorder %v14, 0
  %v18 = vand.u32 %v14, 2139095040
  %v19 = vshrl.u32 %v18, 23
  %v20 = vsub.s32 %v19, 127
  %v21 = vand.u32 2147483647, %v14
  %v22 = vand.u32 %v21, 8388607
  %v23 = vor.u32 %v22, 8388608
  %v24 = vsub.s32 0, %v23
  %v25 = vadd.s32 %v20, 1
  %vm26 = vcmp.gt.s32.totalorder %v25, 0
  %v27 = vsel %vm26, %v25, 0
  %v28 = vshrl.u32 %v27, 5
  %v29 = vand.u32 %v27, 31
  %v30 = vsub.s32 32, %v29
  %v31 = vshrl.u32 683565275, %v30
  %v32 = vshll.u32 683565275, %v29
  %v33 = vshrl.u32 2475754826, %v30
  %v34 = vor.u32 %v32, %v33
  %v35 = vshll.u32 2475754826, %v29
  %v36 = vshrl.u32 2131351028, %v30
  %v37 = vor.u32 %v35, %v36
  %v38 = vshll.u32 2131351028, %v29
  %v39 = vshrl.u32 2102212464, %v30
  %v40 = vor.u32 %v38, %v39
  %v41 = vshll.u32 2102212464, %v29
  %v42 = vshrl.u32 920167782, %v30
  %v43 = vor.u32 %v41, %v42
  %v44 = vshll.u32 920167782, %v29
  %v45 = vshrl.u32 1326507024, %v30
  %v46 = vor.u32 %v44, %v45
  %vm47 = vcmp.lt.s32.totalorder %v28, 1
  %vm48 = vcmp.lt.s32.totalorder %v28, 2
  %vm49 = vcmp.lt.s32.totalorder %v28, 3
  %vm50 = vcmp.lt.s32.totalorder %v28, 4
  %v51 = vsel %vm47, %v31, %v34
  %v52 = vsel %vm50, %v40, 2102212464
  %v53 = vsel %vm49, %v37, %v52
  %v54 = vsel %vm48, %v51, %v53
  %v55 = vsel %vm47, %v34, %v37
  %v56 = vsel %vm50, %v43, 920167782
  %v57 = vsel %vm49, %v40, %v56
  %v58 = vsel %vm48, %v55, %v57
  %v59 = vsel %vm47, %v37, %v40
  %v60 = vsel %vm50, %v46, 1326507024
  %v61 = vsel %vm49, %v43, %v60
  %v62 = vsel %vm48, %v59, %v61
  %v63 = vshll.u32 %v23, 8
  %v64 = vmul.u32.u64.compose %v63, %v62
  %v65 = vextract.low.u32 %v64
  %v66 = vextract.high.u32 %v64
  %v67 = vmul.u32.u64.compose %v63, %v58
  %v68 = vextract.low.u32 %v67
  %v69 = vextract.high.u32 %v67
  %v70 = vmul.u32 %v63, %v54
  %v71 = vadd.s32 %v66, %v68
  %vm72 = vc.u32 %v66, %v68
  %v73 = vadd.s32 %v69, 1
  %v74 = vsel %vm72, %v73, %v69
  %v75 = vadd.s32 %v70, %v74
  %v76 = vadd.s32 %v75, 536870912
  %v77 = vshrl.u32 %v76, 30
  %v78 = vshll.u32 %v77, 30
  %v79 = vsub.s32 %v75, %v78
  %vm80 = vcmp.lt.s32.totalorder %v79, 0
  %v81 = vsub.s32 0, %v79
  %v82 = vsel %vm80, %v81, %v79
  %v83 = vclz %v82
  %v84 = vsub.s32 %v83, 2
  %vm85 = vcmp.gt.s32.totalorder 0, %v84
  %v86 = vsel %vm85, 0, %v84
  %v87 = vsub.s32 32, %v86
  %v88 = vshll.u32 %v79, %v86
  %v89 = vshrl.u32 %v71, %v87
  %v90 = vor.u32 %v88, %v89
  %v91 = vsub.s32 4294967266, %v86
  %v92 = vadd.s32 %v91, 127
  %v93 = vshll.u32 %v92, 23
  %v94 = vor.u32 4788187, %v93
  %v95 = vand.u32 2147483647, %v94
  %v97 = vcvt.s32.f32 %v90
  %v98 = vmul.f32 %v97, %v95
  %v99 = vxor.u32 %v98, 2147483648
  %v100 = vsel %vm17, %v99, %v98
  %v101 = vsub.s32 4, %v77
  %v102 = vsel %vm17, %v101, %v77
  %v103 = vsel %vm16, %v14, %v100
  %v104 = vsel %vm16, 0, %v102
  %v105 = vcosq.f32.pop %v103
  %v106 = vsinq.f32.pop %v103
  %vm107 = vweird.f32 %v14
  %v108 = vand.u32 %v104, 3
  %vm109 = vcmp.lt.s32.totalorder %v108, 2
  %vm110 = vcmp.eq.s32.totalorder %v108, 0
  %v111 = vxor.u32 %v106, 2147483648
  %v112 = vsel %vm110, %v105, %v111
  %vm113 = vcmp.eq.s32.totalorder %v108, 2
  %v114 = vxor.u32 %v105, 2147483648
  %v115 = vsel %vm113, %v114, %v106
  %v116 = vsel %vm109, %v112, %v115
  %v117 = vsel %vm107, nan, %v116
  %v118 = vand.u32 2147483647, %v14
  %vm119 = vcmp.le.f32.partialorder %v118, 0.7853982
  %vm120 = vcmp.lt.s32.totalorder %v14, 0
  %v121 = vand.u32 %v14, 2139095040
  %v122 = vshrl.u32 %v121, 23
  %v123 = vsub.s32 %v122, 127
  %v124 = vand.u32 2147483647, %v14
  %v125 = vand.u32 %v124, 8388607
  %v126 = vor.u32 %v125, 8388608
  %v127 = vsub.s32 0, %v126
  %v128 = vadd.s32 %v123, 1
  %vm129 = vcmp.gt.s32.totalorder %v128, 0
  %v130 = vsel %vm129, %v128, 0
  %v131 = vshrl.u32 %v130, 5
  %v132 = vand.u32 %v130, 31
  %v133 = vsub.s32 32, %v132
  %v134 = vshrl.u32 683565275, %v133
  %v135 = vshll.u32 683565275, %v132
  %v136 = vshrl.u32 2475754826, %v133
  %v137 = vor.u32 %v135, %v136
  %v138 = vshll.u32 2475754826, %v132
  %v139 = vshrl.u32 2131351028, %v133
  %v140 = vor.u32 %v138, %v139
  %v141 = vshll.u32 2131351028, %v132
  %v142 = vshrl.u32 2102212464, %v133
  %v143 = vor.u32 %v141, %v142
  %v144 = vshll.u32 2102212464, %v132
  %v145 = vshrl.u32 920167782, %v133
  %v146 = vor.u32 %v144, %v145
  %v147 = vshll.u32 920167782, %v132
  %v148 = vshrl.u32 1326507024, %v133
  %v149 = vor.u32 %v147, %v148
  %vm150 = vcmp.lt.s32.totalorder %v131, 1
  %vm151 = vcmp.lt.s32.totalorder %v131, 2
  %vm152 = vcmp.lt.s32.totalorder %v131, 3
  %vm153 = vcmp.lt.s32.totalorder %v131, 4
  %v154 = vsel %vm150, %v134, %v137
  %v155 = vsel %vm153, %v143, 2102212464
  %v156 = vsel %vm152, %v140, %v155
  %v157 = vsel %vm151, %v154, %v156
  %v158 = vsel %vm150, %v137, %v140
  %v159 = vsel %vm153, %v146, 920167782
  %v160 = vsel %vm152, %v143, %v159
  %v161 = vsel %vm151, %v158, %v160
  %v162 = vsel %vm150, %v140, %v143
  %v163 = vsel %vm153, %v149, 1326507024
  %v164 = vsel %vm152, %v146, %v163
  %v165 = vsel %vm151, %v162, %v164
  %v166 = vshll.u32 %v126, 8
  %v167 = vmul.u32.u64.compose %v166, %v165
  %v168 = vextract.low.u32 %v167
  %v169 = vextract.high.u32 %v167
  %v170 = vmul.u32.u64.compose %v166, %v161
  %v171 = vextract.low.u32 %v170
  %v172 = vextract.high.u32 %v170
  %v173 = vmul.u32 %v166, %v157
  %v174 = vadd.s32 %v169, %v171
  %vm175 = vc.u32 %v169, %v171
  %v176 = vadd.s32 %v172, 1
  %v177 = vsel %vm175, %v176, %v172
  %v178 = vadd.s32 %v173, %v177
  %v179 = vadd.s32 %v178, 536870912
  %v180 = vshrl.u32 %v179, 30
  %v181 = vshll.u32 %v180, 30
  %v182 = vsub.s32 %v178, %v181
  %vm183 = vcmp.lt.s32.totalorder %v182, 0
  %v184 = vsub.s32 0, %v182
  %v185 = vsel %vm183, %v184, %v182
  %v186 = vclz %v185
  %v187 = vsub.s32 %v186, 2
  %vm188 = vcmp.gt.s32.totalorder 0, %v187
  %v189 = vsel %vm188, 0, %v187
  %v190 = vsub.s32 32, %v189
  %v191 = vshll.u32 %v182, %v189
  %v192 = vshrl.u32 %v174, %v190
  %v193 = vor.u32 %v191, %v192
  %v194 = vsub.s32 4294967266, %v189
  %v195 = vadd.s32 %v194, 127
  %v196 = vshll.u32 %v195, 23
  %v197 = vor.u32 4788187, %v196
  %v198 = vand.u32 2147483647, %v197
  %v200 = vcvt.s32.f32 %v193
  %v201 = vmul.f32 %v200, %v198
  %v202 = vxor.u32 %v201, 2147483648
  %v203 = vsel %vm120, %v202, %v201
  %v204 = vsub.s32 4, %v180
  %v205 = vsel %vm120, %v204, %v180
  %v206 = vsel %vm119, %v14, %v203
  %v207 = vsel %vm119, 0, %v205
  %v208 = vcosq.f32.pop %v206
  %v209 = vsinq.f32.pop %v206
  %vm210 = vweird.f32 %v14
  %v211 = vadd.s32 %v207, 3
  %v212 = vand.u32 %v211, 3
  %vm213 = vcmp.lt.s32.totalorder %v212, 2
  %vm214 = vcmp.eq.s32.totalorder %v212, 0
  %v215 = vxor.u32 %v209, 2147483648
  %v216 = vsel %vm214, %v208, %v215
  %vm217 = vcmp.eq.s32.totalorder %v212, 2
  %v218 = vxor.u32 %v208, 2147483648
  %v219 = vsel %vm217, %v218, %v209
  %v220 = vsel %vm213, %v216, %v219
  %v221 = vsel %vm210, nan, %v220
  %vm222 = vcmp.gt.f32.partialorder %v10, 1.7628
  %v223 = vsel %vm222, 1.7628, %v10
  %vm224 = vcmp.lt.f32.partialorder %v223, -1.7628
  %v225 = vsel %vm224, -1.7628, %v223
  %v226 = vand.u32 2147483647, %v225
  %vm227 = vcmp.le.f32.partialorder %v226, 0.7853982
  %vm228 = vcmp.lt.s32.totalorder %v225, 0
  %v229 = vand.u32 %v225, 2139095040
  %v230 = vshrl.u32 %v229, 23
  %v231 = vsub.s32 %v230, 127
  %v232 = vand.u32 2147483647, %v225
  %v233 = vand.u32 %v232, 8388607
  %v234 = vor.u32 %v233, 8388608
  %v235 = vsub.s32 0, %v234
  %v236 = vadd.s32 %v231, 1
  %vm237 = vcmp.gt.s32.totalorder %v236, 0
  %v238 = vsel %vm237, %v236, 0
  %v239 = vshrl.u32 %v238, 5
  %v240 = vand.u32 %v238, 31
  %v241 = vsub.s32 32, %v240
  %v242 = vshrl.u32 683565275, %v241
  %v243 = vshll.u32 683565275, %v240
  %v244 = vshrl.u32 2475754826, %v241
  %v245 = vor.u32 %v243, %v244
  %v246 = vshll.u32 2475754826, %v240
  %v247 = vshrl.u32 2131351028, %v241
  %v248 = vor.u32 %v246, %v247
  %v249 = vshll.u32 2131351028, %v240
  %v250 = vshrl.u32 2102212464, %v241
  %v251 = vor.u32 %v249, %v250
  %v252 = vshll.u32 2102212464, %v240
  %v253 = vshrl.u32 920167782, %v241
  %v254 = vor.u32 %v252, %v253
  %v255 = vshll.u32 920167782, %v240
  %v256 = vshrl.u32 1326507024, %v241
  %v257 = vor.u32 %v255, %v256
  %vm258 = vcmp.lt.s32.totalorder %v239, 1
  %vm259 = vcmp.lt.s32.totalorder %v239, 2
  %vm260 = vcmp.lt.s32.totalorder %v239, 3
  %vm261 = vcmp.lt.s32.totalorder %v239, 4
  %v262 = vsel %vm258, %v242, %v245
  %v263 = vsel %vm261, %v251, 2102212464
  %v264 = vsel %vm260, %v248, %v263
  %v265 = vsel %vm259, %v262, %v264
  %v266 = vsel %vm258, %v245, %v248
  %v267 = vsel %vm261, %v254, 920167782
  %v268 = vsel %vm260, %v251, %v267
  %v269 = vsel %vm259, %v266, %v268
  %v270 = vsel %vm258, %v248, %v251
  %v271 = vsel %vm261, %v257, 1326507024
  %v272 = vsel %vm260, %v254, %v271
  %v273 = vsel %vm259, %v270, %v272
  %v274 = vshll.u32 %v234, 8
  %v275 = vmul.u32.u64.compose %v274, %v273
  %v276 = vextract.low.u32 %v275
  %v277 = vextract.high.u32 %v275
  %v278 = vmul.u32.u64.compose %v274, %v269
  %v279 = vextract.low.u32 %v278
  %v280 = vextract.high.u32 %v278
  %v281 = vmul.u32 %v274, %v265
  %v282 = vadd.s32 %v277, %v279
  %vm283 = vc.u32 %v277, %v279
  %v284 = vadd.s32 %v280, 1
  %v285 = vsel %vm283, %v284, %v280
  %v286 = vadd.s32 %v281, %v285
  %v287 = vadd.s32 %v286, 536870912
  %v288 = vshrl.u32 %v287, 30
  %v289 = vshll.u32 %v288, 30
  %v290 = vsub.s32 %v286, %v289
  %vm291 = vcmp.lt.s32.totalorder %v290, 0
  %v292 = vsub.s32 0, %v290
  %v293 = vsel %vm291, %v292, %v290
  %v294 = vclz %v293
  %v295 = vsub.s32 %v294, 2
  %vm296 = vcmp.gt.s32.totalorder 0, %v295
  %v297 = vsel %vm296, 0, %v295
  %v298 = vsub.s32 32, %v297
  %v299 = vshll.u32 %v290, %v297
  %v300 = vshrl.u32 %v282, %v298
  %v301 = vor.u32 %v299, %v300
  %v302 = vsub.s32 4294967266, %v297
  %v303 = vadd.s32 %v302, 127
  %v304 = vshll.u32 %v303, 23
  %v305 = vor.u32 4788187, %v304
  %v306 = vand.u32 2147483647, %v305
  %v308 = vcvt.s32.f32 %v301
  %v309 = vmul.f32 %v308, %v306
  %v310 = vxor.u32 %v309, 2147483648
  %v311 = vsel %vm228, %v310, %v309
  %v312 = vsub.s32 4, %v288
  %v313 = vsel %vm228, %v312, %v288
  %v314 = vsel %vm227, %v225, %v311
  %v315 = vsel %vm227, 0, %v313
  %v316 = vcosq.f32.pop %v314
  %v317 = vsinq.f32.pop %v314
  %vm318 = vweird.f32 %v225
  %v319 = vand.u32 %v315, 3
  %vm320 = vcmp.lt.s32.totalorder %v319, 2
  %vm321 = vcmp.eq.s32.totalorder %v319, 0
  %v322 = vxor.u32 %v317, 2147483648
  %v323 = vsel %vm321, %v316, %v322
  %vm324 = vcmp.eq.s32.totalorder %v319, 2
  %v325 = vxor.u32 %v316, 2147483648
  %v326 = vsel %vm324, %v325, %v317
  %v327 = vsel %vm320, %v323, %v326
  %v328 = vsel %vm318, nan, %v327
  %v329 = vand.u32 2147483647, %v225
  %vm330 = vcmp.le.f32.partialorder %v329, 0.7853982
  %vm331 = vcmp.lt.s32.totalorder %v225, 0
  %v332 = vand.u32 %v225, 2139095040
  %v333 = vshrl.u32 %v332, 23
  %v334 = vsub.s32 %v333, 127
  %v335 = vand.u32 2147483647, %v225
  %v336 = vand.u32 %v335, 8388607
  %v337 = vor.u32 %v336, 8388608
  %v338 = vsub.s32 0, %v337
  %v339 = vadd.s32 %v334, 1
  %vm340 = vcmp.gt.s32.totalorder %v339, 0
  %v341 = vsel %vm340, %v339, 0
  %v342 = vshrl.u32 %v341, 5
  %v343 = vand.u32 %v341, 31
  %v344 = vsub.s32 32, %v343
  %v345 = vshrl.u32 683565275, %v344
  %v346 = vshll.u32 683565275, %v343
  %v347 = vshrl.u32 2475754826, %v344
  %v348 = vor.u32 %v346, %v347
  %v349 = vshll.u32 2475754826, %v343
  %v350 = vshrl.u32 2131351028, %v344
  %v351 = vor.u32 %v349, %v350
  %v352 = vshll.u32 2131351028, %v343
  %v353 = vshrl.u32 2102212464, %v344
  %v354 = vor.u32 %v352, %v353
  %v355 = vshll.u32 2102212464, %v343
  %v356 = vshrl.u32 920167782, %v344
  %v357 = vor.u32 %v355, %v356
  %v358 = vshll.u32 920167782, %v343
  %v359 = vshrl.u32 1326507024, %v344
  %v360 = vor.u32 %v358, %v359
  %vm361 = vcmp.lt.s32.totalorder %v342, 1
  %vm362 = vcmp.lt.s32.totalorder %v342, 2
  %vm363 = vcmp.lt.s32.totalorder %v342, 3
  %vm364 = vcmp.lt.s32.totalorder %v342, 4
  %v365 = vsel %vm361, %v345, %v348
  %v366 = vsel %vm364, %v354, 2102212464
  %v367 = vsel %vm363, %v351, %v366
  %v368 = vsel %vm362, %v365, %v367
  %v369 = vsel %vm361, %v348, %v351
  %v370 = vsel %vm364, %v357, 920167782
  %v371 = vsel %vm363, %v354, %v370
  %v372 = vsel %vm362, %v369, %v371
  %v373 = vsel %vm361, %v351, %v354
  %v374 = vsel %vm364, %v360, 1326507024
  %v375 = vsel %vm363, %v357, %v374
  %v376 = vsel %vm362, %v373, %v375
  %v377 = vshll.u32 %v337, 8
  %v378 = vmul.u32.u64.compose %v377, %v376
  %v379 = vextract.low.u32 %v378
  %v380 = vextract.high.u32 %v378
  %v381 = vmul.u32.u64.compose %v377, %v372
  %v382 = vextract.low.u32 %v381
  %v383 = vextract.high.u32 %v381
  %v384 = vmul.u32 %v377, %v368
  %v385 = vadd.s32 %v380, %v382
  %vm386 = vc.u32 %v380, %v382
  %v387 = vadd.s32 %v383, 1
  %v388 = vsel %vm386, %v387, %v383
  %v389 = vadd.s32 %v384, %v388
  %v390 = vadd.s32 %v389, 536870912
  %v391 = vshrl.u32 %v390, 30
  %v392 = vshll.u32 %v391, 30
  %v393 = vsub.s32 %v389, %v392
  %vm394 = vcmp.lt.s32.totalorder %v393, 0
  %v395 = vsub.s32 0, %v393
  %v396 = vsel %vm394, %v395, %v393
  %v397 = vclz %v396
  %v398 = vsub.s32 %v397, 2
  %vm399 = vcmp.gt.s32.totalorder 0, %v398
  %v400 = vsel %vm399, 0, %v398
  %v401 = vsub.s32 32, %v400
  %v402 = vshll.u32 %v393, %v400
  %v403 = vshrl.u32 %v385, %v401
  %v404 = vor.u32 %v402, %v403
  %v405 = vsub.s32 4294967266, %v400
  %v406 = vadd.s32 %v405, 127
  %v407 = vshll.u32 %v406, 23
  %v408 = vor.u32 4788187, %v407
  %v409 = vand.u32 2147483647, %v408
  %v411 = vcvt.s32.f32 %v404
  %v412 = vmul.f32 %v411, %v409
  %v413 = vxor.u32 %v412, 2147483648
  %v414 = vsel %vm331, %v413, %v412
  %v415 = vsub.s32 4, %v391
  %v416 = vsel %vm331, %v415, %v391
  %v417 = vsel %vm330, %v225, %v414
  %v418 = vsel %vm330, 0, %v416
  %v419 = vcosq.f32.pop %v417
  %v420 = vsinq.f32.pop %v417
  %vm421 = vweird.f32 %v225
  %v422 = vadd.s32 %v418, 3
  %v423 = vand.u32 %v422, 3
  %vm424 = vcmp.lt.s32.totalorder %v423, 2
  %vm425 = vcmp.eq.s32.totalorder %v423, 0
  %v426 = vxor.u32 %v420, 2147483648
  %v427 = vsel %vm425, %v419, %v426
  %vm428 = vcmp.eq.s32.totalorder %v423, 2
  %v429 = vxor.u32 %v419, 2147483648
  %v430 = vsel %vm428, %v429, %v420
  %v431 = vsel %vm424, %v427, %v430
  %v432 = vsel %vm421, nan, %v431
  %vm433 = vcmp.gt.f32.partialorder %v10, -0.0698
  %v434 = vsel %vm433, -0.0698, %v10
  %vm435 = vcmp.lt.f32.partialorder %v434, -3.0718
  %v436 = vsel %vm435, -3.0718, %v434
  %v437 = vand.u32 2147483647, %v436
  %vm438 = vcmp.le.f32.partialorder %v437, 0.7853982
  %vm439 = vcmp.lt.s32.totalorder %v436, 0
  %v440 = vand.u32 %v436, 2139095040
  %v441 = vshrl.u32 %v440, 23
  %v442 = vsub.s32 %v441, 127
  %v443 = vand.u32 2147483647, %v436
  %v444 = vand.u32 %v443, 8388607
  %v445 = vor.u32 %v444, 8388608
  %v446 = vsub.s32 0, %v445
  %v447 = vadd.s32 %v442, 1
  %vm448 = vcmp.gt.s32.totalorder %v447, 0
  %v449 = vsel %vm448, %v447, 0
  %v450 = vshrl.u32 %v449, 5
  %v451 = vand.u32 %v449, 31
  %v452 = vsub.s32 32, %v451
  %v453 = vshrl.u32 683565275, %v452
  %v454 = vshll.u32 683565275, %v451
  %v455 = vshrl.u32 2475754826, %v452
  %v456 = vor.u32 %v454, %v455
  %v457 = vshll.u32 2475754826, %v451
  %v458 = vshrl.u32 2131351028, %v452
  %v459 = vor.u32 %v457, %v458
  %v460 = vshll.u32 2131351028, %v451
  %v461 = vshrl.u32 2102212464, %v452
  %v462 = vor.u32 %v460, %v461
  %v463 = vshll.u32 2102212464, %v451
  %v464 = vshrl.u32 920167782, %v452
  %v465 = vor.u32 %v463, %v464
  %v466 = vshll.u32 920167782, %v451
  %v467 = vshrl.u32 1326507024, %v452
  %v468 = vor.u32 %v466, %v467
  %vm469 = vcmp.lt.s32.totalorder %v450, 1
  %vm470 = vcmp.lt.s32.totalorder %v450, 2
  %vm471 = vcmp.lt.s32.totalorder %v450, 3
  %vm472 = vcmp.lt.s32.totalorder %v450, 4
  %v473 = vsel %vm469, %v453, %v456
  %v474 = vsel %vm472, %v462, 2102212464
  %v475 = vsel %vm471, %v459, %v474
  %v476 = vsel %vm470, %v473, %v475
  %v477 = vsel %vm469, %v456, %v459
  %v478 = vsel %vm472, %v465, 920167782
  %v479 = vsel %vm471, %v462, %v478
  %v480 = vsel %vm470, %v477, %v479
  %v481 = vsel %vm469, %v459, %v462
  %v482 = vsel %vm472, %v468, 1326507024
  %v483 = vsel %vm471, %v465, %v482
  %v484 = vsel %vm470, %v481, %v483
  %v485 = vshll.u32 %v445, 8
  %v486 = vmul.u32.u64.compose %v485, %v484
  %v487 = vextract.low.u32 %v486
  %v488 = vextract.high.u32 %v486
  %v489 = vmul.u32.u64.compose %v485, %v480
  %v490 = vextract.low.u32 %v489
  %v491 = vextract.high.u32 %v489
  %v492 = vmul.u32 %v485, %v476
  %v493 = vadd.s32 %v488, %v490
  %vm494 = vc.u32 %v488, %v490
  %v495 = vadd.s32 %v491, 1
  %v496 = vsel %vm494, %v495, %v491
  %v497 = vadd.s32 %v492, %v496
  %v498 = vadd.s32 %v497, 536870912
  %v499 = vshrl.u32 %v498, 30
  %v500 = vshll.u32 %v499, 30
  %v501 = vsub.s32 %v497, %v500
  %vm502 = vcmp.lt.s32.totalorder %v501, 0
  %v503 = vsub.s32 0, %v501
  %v504 = vsel %vm502, %v503, %v501
  %v505 = vclz %v504
  %v506 = vsub.s32 %v505, 2
  %vm507 = vcmp.gt.s32.totalorder 0, %v506
  %v508 = vsel %vm507, 0, %v506
  %v509 = vsub.s32 32, %v508
  %v510 = vshll.u32 %v501, %v508
  %v511 = vshrl.u32 %v493, %v509
  %v512 = vor.u32 %v510, %v511
  %v513 = vsub.s32 4294967266, %v508
  %v514 = vadd.s32 %v513, 127
  %v515 = vshll.u32 %v514, 23
  %v516 = vor.u32 4788187, %v515
  %v517 = vand.u32 2147483647, %v516
  %v519 = vcvt.s32.f32 %v512
  %v520 = vmul.f32 %v519, %v517
  %v521 = vxor.u32 %v520, 2147483648
  %v522 = vsel %vm439, %v521, %v520
  %v523 = vsub.s32 4, %v499
  %v524 = vsel %vm439, %v523, %v499
  %v525 = vsel %vm438, %v436, %v522
  %v526 = vsel %vm438, 0, %v524
  %v527 = vcosq.f32.pop %v525
  %v528 = vsinq.f32.pop %v525
  %vm529 = vweird.f32 %v436
  %v530 = vand.u32 %v526, 3
  %vm531 = vcmp.lt.s32.totalorder %v530, 2
  %vm532 = vcmp.eq.s32.totalorder %v530, 0
  %v533 = vxor.u32 %v528, 2147483648
  %v534 = vsel %vm532, %v527, %v533
  %vm535 = vcmp.eq.s32.totalorder %v530, 2
  %v536 = vxor.u32 %v527, 2147483648
  %v537 = vsel %vm535, %v536, %v528
  %v538 = vsel %vm531, %v534, %v537
  %v539 = vsel %vm529, nan, %v538
  %v540 = vand.u32 2147483647, %v436
  %vm541 = vcmp.le.f32.partialorder %v540, 0.7853982
  %vm542 = vcmp.lt.s32.totalorder %v436, 0
  %v543 = vand.u32 %v436, 2139095040
  %v544 = vshrl.u32 %v543, 23
  %v545 = vsub.s32 %v544, 127
  %v546 = vand.u32 2147483647, %v436
  %v547 = vand.u32 %v546, 8388607
  %v548 = vor.u32 %v547, 8388608
  %v549 = vsub.s32 0, %v548
  %v550 = vadd.s32 %v545, 1
  %vm551 = vcmp.gt.s32.totalorder %v550, 0
  %v552 = vsel %vm551, %v550, 0
  %v553 = vshrl.u32 %v552, 5
  %v554 = vand.u32 %v552, 31
  %v555 = vsub.s32 32, %v554
  %v556 = vshrl.u32 683565275, %v555
  %v557 = vshll.u32 683565275, %v554
  %v558 = vshrl.u32 2475754826, %v555
  %v559 = vor.u32 %v557, %v558
  %v560 = vshll.u32 2475754826, %v554
  %v561 = vshrl.u32 2131351028, %v555
  %v562 = vor.u32 %v560, %v561
  %v563 = vshll.u32 2131351028, %v554
  %v564 = vshrl.u32 2102212464, %v555
  %v565 = vor.u32 %v563, %v564
  %v566 = vshll.u32 2102212464, %v554
  %v567 = vshrl.u32 920167782, %v555
  %v568 = vor.u32 %v566, %v567
  %v569 = vshll.u32 920167782, %v554
  %v570 = vshrl.u32 1326507024, %v555
  %v571 = vor.u32 %v569, %v570
  %vm572 = vcmp.lt.s32.totalorder %v553, 1
  %vm573 = vcmp.lt.s32.totalorder %v553, 2
  %vm574 = vcmp.lt.s32.totalorder %v553, 3
  %vm575 = vcmp.lt.s32.totalorder %v553, 4
  %v576 = vsel %vm572, %v556, %v559
  %v577 = vsel %vm575, %v565, 2102212464
  %v578 = vsel %vm574, %v562, %v577
  %v579 = vsel %vm573, %v576, %v578
  %v580 = vsel %vm572, %v559, %v562
  %v581 = vsel %vm575, %v568, 920167782
  %v582 = vsel %vm574, %v565, %v581
  %v583 = vsel %vm573, %v580, %v582
  %v584 = vsel %vm572, %v562, %v565
  %v585 = vsel %vm575, %v571, 1326507024
  %v586 = vsel %vm574, %v568, %v585
  %v587 = vsel %vm573, %v584, %v586
  %v588 = vshll.u32 %v548, 8
  %v589 = vmul.u32.u64.compose %v588, %v587
  %v590 = vextract.low.u32 %v589
  %v591 = vextract.high.u32 %v589
  %v592 = vmul.u32.u64.compose %v588, %v583
  %v593 = vextract.low.u32 %v592
  %v594 = vextract.high.u32 %v592
  %v595 = vmul.u32 %v588, %v579
  %v596 = vadd.s32 %v591, %v593
  %vm597 = vc.u32 %v591, %v593
  %v598 = vadd.s32 %v594, 1
  %v599 = vsel %vm597, %v598, %v594
  %v600 = vadd.s32 %v595, %v599
  %v601 = vadd.s32 %v600, 536870912
  %v602 = vshrl.u32 %v601, 30
  %v603 = vshll.u32 %v602, 30
  %v604 = vsub.s32 %v600, %v603
  %vm605 = vcmp.lt.s32.totalorder %v604, 0
  %v606 = vsub.s32 0, %v604
  %v607 = vsel %vm605, %v606, %v604
  %v608 = vclz %v607
  %v609 = vsub.s32 %v608, 2
  %vm610 = vcmp.gt.s32.totalorder 0, %v609
  %v611 = vsel %vm610, 0, %v609
  %v612 = vsub.s32 32, %v611
  %v613 = vshll.u32 %v604, %v611
  %v614 = vshrl.u32 %v596, %v612
  %v615 = vor.u32 %v613, %v614
  %v616 = vsub.s32 4294967266, %v611
  %v617 = vadd.s32 %v616, 127
  %v618 = vshll.u32 %v617, 23
  %v619 = vor.u32 4788187, %v618
  %v620 = vand.u32 2147483647, %v619
  %v622 = vcvt.s32.f32 %v615
  %v623 = vmul.f32 %v622, %v620
  %v624 = vxor.u32 %v623, 2147483648
  %v625 = vsel %vm542, %v624, %v623
  %v626 = vsub.s32 4, %v602
  %v627 = vsel %vm542, %v626, %v602
  %v628 = vsel %vm541, %v436, %v625
  %v629 = vsel %vm541, 0, %v627
  %v630 = vcosq.f32.pop %v628
  %v631 = vsinq.f32.pop %v628
  %vm632 = vweird.f32 %v436
  %v633 = vadd.s32 %v629, 3
  %v634 = vand.u32 %v633, 3
  %vm635 = vcmp.lt.s32.totalorder %v634, 2
  %vm636 = vcmp.eq.s32.totalorder %v634, 0
  %v637 = vxor.u32 %v631, 2147483648
  %v638 = vsel %vm636, %v630, %v637
  %vm639 = vcmp.eq.s32.totalorder %v634, 2
  %v640 = vxor.u32 %v630, 2147483648
  %v641 = vsel %vm639, %v640, %v631
  %v642 = vsel %vm635, %v638, %v641
  %v643 = vsel %vm632, nan, %v642
  %vm644 = vcmp.gt.f32.partialorder %v10, 3.7525
  %v645 = vsel %vm644, 3.7525, %v10
  %vm646 = vcmp.lt.f32.partialorder %v645, -0.0175
  %v647 = vsel %vm646, -0.0175, %v645
  %v648 = vand.u32 2147483647, %v647
  %vm649 = vcmp.le.f32.partialorder %v648, 0.7853982
  %vm650 = vcmp.lt.s32.totalorder %v647, 0
  %v651 = vand.u32 %v647, 2139095040
  %v652 = vshrl.u32 %v651, 23
  %v653 = vsub.s32 %v652, 127
  %v654 = vand.u32 2147483647, %v647
  %v655 = vand.u32 %v654, 8388607
  %v656 = vor.u32 %v655, 8388608
  %v657 = vsub.s32 0, %v656
  %v658 = vadd.s32 %v653, 1
  %vm659 = vcmp.gt.s32.totalorder %v658, 0
  %v660 = vsel %vm659, %v658, 0
  %v661 = vshrl.u32 %v660, 5
  %v662 = vand.u32 %v660, 31
  %v663 = vsub.s32 32, %v662
  %v664 = vshrl.u32 683565275, %v663
  %v665 = vshll.u32 683565275, %v662
  %v666 = vshrl.u32 2475754826, %v663
  %v667 = vor.u32 %v665, %v666
  %v668 = vshll.u32 2475754826, %v662
  %v669 = vshrl.u32 2131351028, %v663
  %v670 = vor.u32 %v668, %v669
  %v671 = vshll.u32 2131351028, %v662
  %v672 = vshrl.u32 2102212464, %v663
  %v673 = vor.u32 %v671, %v672
  %v674 = vshll.u32 2102212464, %v662
  %v675 = vshrl.u32 920167782, %v663
  %v676 = vor.u32 %v674, %v675
  %v677 = vshll.u32 920167782, %v662
  %v678 = vshrl.u32 1326507024, %v663
  %v679 = vor.u32 %v677, %v678
  %vm680 = vcmp.lt.s32.totalorder %v661, 1
  %vm681 = vcmp.lt.s32.totalorder %v661, 2
  %vm682 = vcmp.lt.s32.totalorder %v661, 3
  %vm683 = vcmp.lt.s32.totalorder %v661, 4
  %v684 = vsel %vm680, %v664, %v667
  %v685 = vsel %vm683, %v673, 2102212464
  %v686 = vsel %vm682, %v670, %v685
  %v687 = vsel %vm681, %v684, %v686
  %v688 = vsel %vm680, %v667, %v670
  %v689 = vsel %vm683, %v676, 920167782
  %v690 = vsel %vm682, %v673, %v689
  %v691 = vsel %vm681, %v688, %v690
  %v692 = vsel %vm680, %v670, %v673
  %v693 = vsel %vm683, %v679, 1326507024
  %v694 = vsel %vm682, %v676, %v693
  %v695 = vsel %vm681, %v692, %v694
  %v696 = vshll.u32 %v656, 8
  %v697 = vmul.u32.u64.compose %v696, %v695
  %v698 = vextract.low.u32 %v697
  %v699 = vextract.high.u32 %v697
  %v700 = vmul.u32.u64.compose %v696, %v691
  %v701 = vextract.low.u32 %v700
  %v702 = vextract.high.u32 %v700
  %v703 = vmul.u32 %v696, %v687
  %v704 = vadd.s32 %v699, %v701
  %vm705 = vc.u32 %v699, %v701
  %v706 = vadd.s32 %v702, 1
  %v707 = vsel %vm705, %v706, %v702
  %v708 = vadd.s32 %v703, %v707
  %v709 = vadd.s32 %v708, 536870912
  %v710 = vshrl.u32 %v709, 30
  %v711 = vshll.u32 %v710, 30
  %v712 = vsub.s32 %v708, %v711
  %vm713 = vcmp.lt.s32.totalorder %v712, 0
  %v714 = vsub.s32 0, %v712
  %v715 = vsel %vm713, %v714, %v712
  %v716 = vclz %v715
  %v717 = vsub.s32 %v716, 2
  %vm718 = vcmp.gt.s32.totalorder 0, %v717
  %v719 = vsel %vm718, 0, %v717
  %v720 = vsub.s32 32, %v719
  %v721 = vshll.u32 %v712, %v719
  %v722 = vshrl.u32 %v704, %v720
  %v723 = vor.u32 %v721, %v722
  %v724 = vsub.s32 4294967266, %v719
  %v725 = vadd.s32 %v724, 127
  %v726 = vshll.u32 %v725, 23
  %v727 = vor.u32 4788187, %v726
  %v728 = vand.u32 2147483647, %v727
  %v730 = vcvt.s32.f32 %v723
  %v731 = vmul.f32 %v730, %v728
  %v732 = vxor.u32 %v731, 2147483648
  %v733 = vsel %vm650, %v732, %v731
  %v734 = vsub.s32 4, %v710
  %v735 = vsel %vm650, %v734, %v710
  %v736 = vsel %vm649, %v647, %v733
  %v737 = vsel %vm649, 0, %v735
  %v738 = vcosq.f32.pop %v736
  %v739 = vsinq.f32.pop %v736
  %vm740 = vweird.f32 %v647
  %v741 = vand.u32 %v737, 3
  %vm742 = vcmp.lt.s32.totalorder %v741, 2
  %vm743 = vcmp.eq.s32.totalorder %v741, 0
  %v744 = vxor.u32 %v739, 2147483648
  %v745 = vsel %vm743, %v738, %v744
  %vm746 = vcmp.eq.s32.totalorder %v741, 2
  %v747 = vxor.u32 %v738, 2147483648
  %v748 = vsel %vm746, %v747, %v739
  %v749 = vsel %vm742, %v745, %v748
  %v750 = vsel %vm740, nan, %v749
  %v751 = vand.u32 2147483647, %v647
  %vm752 = vcmp.le.f32.partialorder %v751, 0.7853982
  %vm753 = vcmp.lt.s32.totalorder %v647, 0
  %v754 = vand.u32 %v647, 2139095040
  %v755 = vshrl.u32 %v754, 23
  %v756 = vsub.s32 %v755, 127
  %v757 = vand.u32 2147483647, %v647
  %v758 = vand.u32 %v757, 8388607
  %v759 = vor.u32 %v758, 8388608
  %v760 = vsub.s32 0, %v759
  %v761 = vadd.s32 %v756, 1
  %vm762 = vcmp.gt.s32.totalorder %v761, 0
  %v763 = vsel %vm762, %v761, 0
  %v764 = vshrl.u32 %v763, 5
  %v765 = vand.u32 %v763, 31
  %v766 = vsub.s32 32, %v765
  %v767 = vshrl.u32 683565275, %v766
  %v768 = vshll.u32 683565275, %v765
  %v769 = vshrl.u32 2475754826, %v766
  %v770 = vor.u32 %v768, %v769
  %v771 = vshll.u32 2475754826, %v765
  %v772 = vshrl.u32 2131351028, %v766
  %v773 = vor.u32 %v771, %v772
  %v774 = vshll.u32 2131351028, %v765
  %v775 = vshrl.u32 2102212464, %v766
  %v776 = vor.u32 %v774, %v775
  %v777 = vshll.u32 2102212464, %v765
  %v778 = vshrl.u32 920167782, %v766
  %v779 = vor.u32 %v777, %v778
  %v780 = vshll.u32 920167782, %v765
  %v781 = vshrl.u32 1326507024, %v766
  %v782 = vor.u32 %v780, %v781
  %vm783 = vcmp.lt.s32.totalorder %v764, 1
  %vm784 = vcmp.lt.s32.totalorder %v764, 2
  %vm785 = vcmp.lt.s32.totalorder %v764, 3
  %vm786 = vcmp.lt.s32.totalorder %v764, 4
  %v787 = vsel %vm783, %v767, %v770
  %v788 = vsel %vm786, %v776, 2102212464
  %v789 = vsel %vm785, %v773, %v788
  %v790 = vsel %vm784, %v787, %v789
  %v791 = vsel %vm783, %v770, %v773
  %v792 = vsel %vm786, %v779, 920167782
  %v793 = vsel %vm785, %v776, %v792
  %v794 = vsel %vm784, %v791, %v793
  %v795 = vsel %vm783, %v773, %v776
  %v796 = vsel %vm786, %v782, 1326507024
  %v797 = vsel %vm785, %v779, %v796
  %v798 = vsel %vm784, %v795, %v797
  %v799 = vshll.u32 %v759, 8
  %v800 = vmul.u32.u64.compose %v799, %v798
  %v801 = vextract.low.u32 %v800
  %v802 = vextract.high.u32 %v800
  %v803 = vmul.u32.u64.compose %v799, %v794
  %v804 = vextract.low.u32 %v803
  %v805 = vextract.high.u32 %v803
  %v806 = vmul.u32 %v799, %v790
  %v807 = vadd.s32 %v802, %v804
  %vm808 = vc.u32 %v802, %v804
  %v809 = vadd.s32 %v805, 1
  %v810 = vsel %vm808, %v809, %v805
  %v811 = vadd.s32 %v806, %v810
  %v812 = vadd.s32 %v811, 536870912
  %v813 = vshrl.u32 %v812, 30
  %v814 = vshll.u32 %v813, 30
  %v815 = vsub.s32 %v811, %v814
  %vm816 = vcmp.lt.s32.totalorder %v815, 0
  %v817 = vsub.s32 0, %v815
  %v818 = vsel %vm816, %v817, %v815
  %v819 = vclz %v818
  %v820 = vsub.s32 %v819, 2
  %vm821 = vcmp.gt.s32.totalorder 0, %v820
  %v822 = vsel %vm821, 0, %v820
  %v823 = vsub.s32 32, %v822
  %v824 = vshll.u32 %v815, %v822
  %v825 = vshrl.u32 %v807, %v823
  %v826 = vor.u32 %v824, %v825
  %v827 = vsub.s32 4294967266, %v822
  %v828 = vadd.s32 %v827, 127
  %v829 = vshll.u32 %v828, 23
  %v830 = vor.u32 4788187, %v829
  %v831 = vand.u32 2147483647, %v830
  %v833 = vcvt.s32.f32 %v826
  %v834 = vmul.f32 %v833, %v831
  %v835 = vxor.u32 %v834, 2147483648
  %v836 = vsel %vm753, %v835, %v834
  %v837 = vsub.s32 4, %v813
  %v838 = vsel %vm753, %v837, %v813
  %v839 = vsel %vm752, %v647, %v836
  %v840 = vsel %vm752, 0, %v838
  %v841 = vcosq.f32.pop %v839
  %v842 = vsinq.f32.pop %v839
  %vm843 = vweird.f32 %v647
  %v844 = vadd.s32 %v840, 3
  %v845 = vand.u32 %v844, 3
  %vm846 = vcmp.lt.s32.totalorder %v845, 2
  %vm847 = vcmp.eq.s32.totalorder %v845, 0
  %v848 = vxor.u32 %v842, 2147483648
  %v849 = vsel %vm847, %v841, %v848
  %vm850 = vcmp.eq.s32.totalorder %v845, 2
  %v851 = vxor.u32 %v841, 2147483648
  %v852 = vsel %vm850, %v851, %v842
  %v853 = vsel %vm846, %v849, %v852
  %v854 = vsel %vm843, nan, %v853
  %v855 = vlaneseq
  %v856 = vshrl.u32 %v855, 7
  %vm857 = vcmp.eq.s32.totalorder %v856, 0
  %v858 = vsel %vm857, 1, 0
  %v859 = vcvt.s32.f32 %v858
  %vm860 = vcmp.eq.s32.totalorder %v856, 1
  %v861 = vsel %vm860, 1, 0
  %v862 = vcvt.s32.f32 %v861
  %vm863 = vcmp.eq.s32.totalorder %v856, 2
  %v864 = vsel %vm863, 1, 0
  %v865 = vcvt.s32.f32 %v864
  %v866 = vmul.f32 %v865, 0.333
  %v867 = vadd.f32 %v866, 0.0
  %v868 = vlaneseq
  %v869 = vshrl.u32 %v868, 7
  %v870 = vsub.s32 0, %v869
  %v871 = vrot.slane %v117, %v870
  %v872 = vmul.f32 %v871, %v859
  %v873 = vlaneseq
  %v874 = vshrl.u32 %v873, 7
  %v875 = vsub.s32 0, %v874
  %v876 = vrot.slane %v221, %v875
  %v877 = vmul.f32 %v876, %v862
  %v878 = vadd.f32 %v872, %v877
  %v879 = vmul.f32 %v871, %v862
  %v880 = vmul.f32 %v876, %v859
  %v881 = vsub.f32 %v879, %v880
  %v882 = vsub.f32 0.0, %v865
  %v883 = vlaneseq
  %v884 = vshrl.u32 %v883, 7
  %v885 = vsub.s32 1, %v884
  %v886 = vrot.slane %v328, %v885
  %v887 = vmul.f32 %v886, %v878
  %v888 = vlaneseq
  %v889 = vshrl.u32 %v888, 7
  %v890 = vsub.s32 1, %v889
  %v891 = vrot.slane %v432, %v890
  %v892 = vmul.f32 %v891, %v882
  %v893 = vadd.f32 %v887, %v892
  %v894 = vmul.f32 %v886, %v882
  %v895 = vmul.f32 %v891, %v878
  %v896 = vsub.f32 %v894, %v895
  %v897 = vsub.f32 0.0, %v896
  %v898 = vmul.f32 %v896, -0.316
  %v899 = vadd.f32 %v867, %v898
  %v900 = vlaneseq
  %v901 = vshrl.u32 %v900, 7
  %v902 = vsub.s32 2, %v901
  %v903 = vrot.slane %v117, %v902
  %v904 = vmul.f32 %v903, %v893
  %v905 = vlaneseq
  %v906 = vshrl.u32 %v905, 7
  %v907 = vsub.s32 2, %v906
  %v908 = vrot.slane %v221, %v907
  %v909 = vmul.f32 %v908, %v881
  %v910 = vadd.f32 %v904, %v909
  %v911 = vmul.f32 %v903, %v881
  %v912 = vmul.f32 %v908, %v893
  %v913 = vsub.f32 %v911, %v912
  %v914 = vsub.f32 0.0, %v913
  %v915 = vmul.f32 %v910, 0.0825
  %v916 = vadd.f32 %v899, %v915
  %v917 = vlaneseq
  %v918 = vshrl.u32 %v917, 7
  %v919 = vsub.s32 3, %v918
  %v920 = vrot.slane %v539, %v919
  %v921 = vmul.f32 %v920, %v910
  %v922 = vlaneseq
  %v923 = vshrl.u32 %v922, 7
  %v924 = vsub.s32 3, %v923
  %v925 = vrot.slane %v643, %v924
  %v926 = vmul.f32 %v925, %v897
  %v927 = vadd.f32 %v921, %v926
  %v928 = vmul.f32 %v920, %v897
  %v929 = vmul.f32 %v925, %v910
  %v930 = vsub.f32 %v928, %v929
  %v931 = vsub.f32 0.0, %v914
  %v932 = vmul.f32 %v927, -0.0825
  %v933 = vadd.f32 %v916, %v932
  %v934 = vmul.f32 %v930, 0.384
  %v935 = vadd.f32 %v933, %v934
  %v936 = vlaneseq
  %v937 = vshrl.u32 %v936, 7
  %v938 = vsub.s32 4, %v937
  %v939 = vrot.slane %v117, %v938
  %v940 = vmul.f32 %v939, %v927
  %v941 = vlaneseq
  %v942 = vshrl.u32 %v941, 7
  %v943 = vsub.s32 4, %v942
  %v944 = vrot.slane %v221, %v943
  %v945 = vmul.f32 %v944, %v931
  %v946 = vadd.f32 %v940, %v945
  %v947 = vlaneseq
  %v948 = vshrl.u32 %v947, 7
  %v949 = vsub.s32 5, %v948
  %v950 = vrot.slane %v750, %v949
  %v951 = vmul.f32 %v950, %v946
  %v952 = vlaneseq
  %v953 = vshrl.u32 %v952, 7
  %v954 = vsub.s32 5, %v953
  %v955 = vrot.slane %v854, %v954
  %v956 = vmul.f32 %v955, %v930
  %v957 = vadd.f32 %v951, %v956
  %v958 = vmul.f32 %v950, %v930
  %v959 = vmul.f32 %v955, %v946
  %v960 = vsub.f32 %v958, %v959
  %v961 = vsub.f32 0.0, %v960
  %v962 = vmul.f32 %v957, 0.088
  %v963 = vadd.f32 %v935, %v962
  %v964 = vmul.f32 %v961, 0.207
  %v965 = vadd.f32 %v963, %v964
  %966 = vst [vmem:[%s1] sm:$0x1] %v14
  %967 = vst [vmem:[%s1] sm:$0x2] %v225
  %968 = vst [vmem:[%s1] sm:$0x4] %v14
  %969 = vst [vmem:[%s1] sm:$0x8] %v436
  %970 = vst [vmem:[%s1] sm:$0x10] %v14
  %971 = vst [vmem:[%s1] sm:$0x20] %v647
  %972 = vst [vmem:[%s1] sm:$0x40] %v14
  %973 = vst [vmem:[%s1 + $0x7] sm:$0x1] 0.0
  %974 = vst [vmem:[%s1 + $0x8] sm:$0x7] %v965
  %975 = vst [vmem:[%s1 + $0xb] sm:$0x1f] 0.0
  // Predicated region
  $region6: #{_fk_pallas.1} parent=0 // pred_check
    _
  $region7: #{_fk_pallas.1} parent=0 // pred_check_branch
    %977 = sbr.rel (0) target = $region9
  $region8: #{_fk_pallas.1} parent=0 // pred_region
    _
  $region9: #{_fk_pallas.1} parent=0 // pred_fallthru
    _
  // Predicated region
  $region10: #{_fk_pallas.1} parent=0 // pred_check
    _
  $region11: #{_fk_pallas.1} parent=0 // pred_check_branch
    %979 = sbr.rel (0) target = $region13
  $region12: #{_fk_pallas.1} parent=0 // pred_region
    _
  $region13: #{_fk_pallas.1} parent=0 // pred_fallthru
    _

</llo_original>
